<compile_context>
chip_gen: v5e
topology: v5e:2x2
jax: 0.10.0
libtpu: 0.0.40
codegen_flags: <defaults>
</compile_context>

<pallas_src>
import math

import jax
import jax.numpy as jnp
from jax.experimental import pallas as pl
from jax.experimental.pallas import tpu as pltpu

_SQRT_2_OVER_PI = math.sqrt(2.0 / math.pi)
_GELU_COEF = 0.044715
# Folded constants (cuts VALU ops per element).
_C1 = _SQRT_2_OVER_PI
_C2 = _SQRT_2_OVER_PI * _GELU_COEF

# Lane widths to try (largest first); all multiples of 128 -> lane-dense.
_LANE_CANDIDATES = (8192, 4096, 2048, 1024, 512, 256, 128)

_TARGET_BLOCK_BYTES = 4 * 1024 * 1024   # ~4 MiB per block
_MIN_GRID_STEPS = 8                     # >= 4 steps per TC on v7x megacore
_ROW_ALIGN = 32                         # sublane tile for f32/bf16/int8
_MIN_PALLAS_ELEMS = 32 * 1024           # below this, plain jnp wins
_VMEM_CAP = 48 * 1024 * 1024            # headroom under v7x's 64 MiB VMEM


def _gelu_math(x):
    """Tanh-approx GELU: x * (0.5 + 0.5 * tanh(x * (c1 + c2 * x^2))).

    Python-float constants are weakly typed, so bf16 inputs stay bf16
    (doubles VALU/EUP throughput on v6e/v7x); f32 inputs stay f32.
    """
    # TODO(synk): verify in the Mosaic dump that jnp.tanh lowers to a single
    # EUP op; if it decomposes into exp+divide, rewrite via the sigmoid form
    # with pl.reciprocal(..., approx=True) to keep the EUP slot free-ish.
    t = jnp.tanh(x * (_C1 + _C2 * x * x))
    return x * (0.5 + 0.5 * t)


def _gelu_kernel(x_ref, o_ref):
    x = x_ref[...]
    if x.dtype == jnp.bfloat16:
        # bf16 compute: keeps v7x (and marginally v6e) at the HBM roofline.
        # Still numerically correct on v5e (no bf16 VPU/EUP, just slower).
        y = _gelu_math(x)
    else:
        y = _gelu_math(x.astype(jnp.float32))
    o_ref[...] = y.astype(o_ref.dtype)


def _gelu_jnp(x):
    """Plain-XLA fallback (tiny tensors / awkward ragged layouts)."""
    if x.dtype == jnp.bfloat16:
        return _gelu_math(x)
    return _gelu_math(x.astype(jnp.float32)).astype(x.dtype)


def _round_down(v: int, m: int) -> int:
    return max((v // m) * m, m)


def _run_gelu_2d(x2d: jax.Array) -> jax.Array:
    """Run the kernel over a 2-D slab with row-tiled blocks."""
    rows, cols = x2d.shape
    itemsize = jnp.dtype(x2d.dtype).itemsize

    # Rows per block: ~4 MiB target, multiple of 32 rows so the sublane
    # tiling constraint holds for every dtype width.
    tile_rows = _TARGET_BLOCK_BYTES // max(cols * itemsize, 1)
    tile_rows = _round_down(max(tile_rows, _ROW_ALIGN), _ROW_ALIGN)
    # Keep >= _MIN_GRID_STEPS grid steps when the tensor is big enough so
    # each TensorCore (v7x shards the "parallel" axis across 2 TCs) still
    # double-buffers its DMAs instead of running one serialized block.
    if rows >= _MIN_GRID_STEPS * _ROW_ALIGN:
        tile_rows = min(
            tile_rows,
            _round_down(pl.cdiv(rows, _MIN_GRID_STEPS), _ROW_ALIGN))
    if tile_rows >= rows:
        tile_rows = rows  # whole-array block is always a legal block shape

    grid = (pl.cdiv(rows, tile_rows),)
    block_bytes = tile_rows * cols * itemsize
    # Raise scoped VMEM past v5e's 16 MiB default; cap at 48 MiB to leave
    # >= 16 MiB headroom under v7x's 64 MiB physical VMEM.
    vmem_limit = int(min(_VMEM_CAP, max(32 * 1024 * 1024, 5 * block_bytes)))

    return pl.pallas_call(
        _gelu_kernel,
        out_shape=jax.ShapeDtypeStruct((rows, cols), x2d.dtype),
        grid_spec=pltpu.PrefetchScalarGridSpec(
            num_scalar_prefetch=0,
            grid=grid,
            in_specs=[pl.BlockSpec((tile_rows, cols), lambda i: (i, 0))],
            out_specs=pl.BlockSpec((tile_rows, cols), lambda i: (i, 0)),
        ),
        compiler_params=pltpu.CompilerParams(
            dimension_semantics=("parallel",),
            vmem_limit_bytes=vmem_limit,
        ),
    )(x2d)


def gelu_pallas(x: jax.Array, *, force_pallas: bool = False) -> jax.Array:
    """Tanh-approx GELU, elementwise, any shape / dtype."""
    orig_shape = x.shape
    n = x.size
    if n == 0:
        return x

    # Tiny-input fast path: kernel launch + DMA setup dominates there.
    if not force_pallas and n < _MIN_PALLAS_ELEMS:
        return _gelu_jnp(x)

    if n % 128 == 0:
        # Lane-dense path: flatten (free view) and re-chunk with the largest
        # lane width dividing n -> unmasked full-width stores.
        lane = next(c for c in _LANE_CANDIDATES if n % c == 0)
        x2d = x.reshape(n // lane, lane)
        return _run_gelu_2d(x2d).reshape(orig_shape)

    # Ragged element count (n % 128 != 0): no pad/slice round trips (those
    # would cost ~2 extra full HBM passes).  Collapse leading dims (free
    # view) and tile with full-last-dim blocks; stores are masked but HBM
    # traffic stays at exactly 1 read + 1 write.
    itemsize = jnp.dtype(x.dtype).itemsize
    if x.ndim >= 2:
        cols = orig_shape[-1]
        if cols >= 128 and _ROW_ALIGN * cols * itemsize <= 8 * 1024 * 1024:
            x2d = x.reshape(n // cols, cols)
            return _run_gelu_2d(x2d).reshape(orig_shape)

    # TODO(synk): 1-D ragged / tiny-last-dim tensors fall back to plain jnp;
    # XLA's elementwise fusion is already at the HBM roofline for them.
    return _gelu_jnp(x)


def gelu_reference(x: jax.Array) -> jax.Array:
    xf = x.astype(jnp.float32)
    y = 0.5 * xf * (1.0 + jnp.tanh(_SQRT_2_OVER_PI * (xf + _GELU_COEF * xf ** 3)))
    return y.astype(x.dtype)


if __name__ == "__main__":
    key = jax.random.PRNGKey(0)
    k1, k2, k3, k4 = jax.random.split(key, 4)

    # 1) Small ViT-MLP-style activation (batch, seq, hidden); forced through
    #    the Pallas kernel so the kernel path itself is exercised.
    x1 = jax.random.normal(k1, (2, 8, 32), dtype=jnp.float32)
    o1 = jax.block_until_ready(gelu_pallas(x1, force_pallas=True))
    r1 = gelu_reference(x1)
    if not jnp.allclose(o1, r1, atol=1e-5, rtol=1e-5):
        raise AssertionError("Pallas GELU mismatch (small case)")

    # 2) Larger non-power-of-two shape: multi-step grid + ragged last block.
    x2 = jax.random.normal(k2, (8, 197, 384), dtype=jnp.float32)
    o2 = jax.block_until_ready(gelu_pallas(x2))
    r2 = gelu_reference(x2)
    if not jnp.allclose(o2, r2, atol=1e-5, rtol=1e-5):
        raise AssertionError("Pallas GELU mismatch (large case)")

    # 3) Ragged element count (n % 128 != 0): full-last-dim masked blocks,
    #    single HBM pass, no pad/slice copies.
    x3 = jax.random.normal(k3, (257, 131), dtype=jnp.float32)
    o3 = jax.block_until_ready(gelu_pallas(x3))
    r3 = gelu_reference(x3)
    if not jnp.allclose(o3, r3, atol=1e-5, rtol=1e-5):
        raise AssertionError("Pallas GELU mismatch (ragged case)")

    # 4) bf16 I/O + bf16 compute path (looser tolerance vs f32 reference).
    x4 = jax.random.normal(k4, (4, 64, 256), dtype=jnp.bfloat16)
    o4 = jax.block_until_ready(gelu_pallas(x4))
    r4 = gelu_reference(x4)
    if not jnp.allclose(o4.astype(jnp.float32), r4.astype(jnp.float32),
                        atol=3e-2, rtol=3e-2):
        raise AssertionError("Pallas GELU mismatch (bf16 case)")

    print("KERNEL_OK")
</pallas_src>

<mosaic_0001>
module attributes {stable_mosaic.version = 11 : i64} {
  func.func @_gelu_kernel(%arg0: i32, %arg1: memref<1x512xf32, #tpu.memory_space<vmem>>, %arg2: memref<1x512xf32, #tpu.memory_space<vmem>>) attributes {dimension_semantics = [#tpu.dimension_semantics<parallel>], iteration_bounds = array<i64: 1>, scalar_prefetch = 0 : i64, scratch_operands = 0 : i64, tpu.core_type = #tpu.core_type<tc>, window_params = [{transform_indices = @transform_0, window_bounds = array<i64: 1, 512>}, {transform_indices = @transform_1, window_bounds = array<i64: 1, 512>}]} {
    %c0 = arith.constant 0 : index
    %c0_0 = arith.constant 0 : index
    %0 = vector.load %arg1[%c0, %c0_0] : memref<1x512xf32, #tpu.memory_space<vmem>>, vector<1x512xf32>
    %cst = arith.constant 0.0356774069 : f32
    %1 = vector.broadcast %cst : f32 to vector<1x512xf32>
    %2 = arith.mulf %1, %0 : vector<1x512xf32>
    %3 = arith.mulf %2, %0 : vector<1x512xf32>
    %cst_1 = arith.constant 0.797884583 : f32
    %4 = vector.broadcast %cst_1 : f32 to vector<1x512xf32>
    %5 = arith.addf %4, %3 : vector<1x512xf32>
    %6 = arith.mulf %0, %5 : vector<1x512xf32>
    %7 = math.tanh %6 : vector<1x512xf32>
    %cst_2 = arith.constant 5.000000e-01 : f32
    %8 = vector.broadcast %cst_2 : f32 to vector<1x512xf32>
    %9 = arith.mulf %8, %7 : vector<1x512xf32>
    %cst_3 = arith.constant 5.000000e-01 : f32
    %10 = vector.broadcast %cst_3 : f32 to vector<1x512xf32>
    %11 = arith.addf %10, %9 : vector<1x512xf32>
    %12 = arith.mulf %0, %11 : vector<1x512xf32>
    %c0_4 = arith.constant 0 : index
    %c0_5 = arith.constant 0 : index
    %13 = vector.load %arg2[%c0_4, %c0_5] : memref<1x512xf32, #tpu.memory_space<vmem>>, vector<1x512xf32>
    tpu.vector_store %arg2[%c0_4, %c0_5], %12 {strides = array<i32>} : memref<1x512xf32, #tpu.memory_space<vmem>>, vector<1x512xf32>,
    return
  }
  func.func @transform_0(%arg0: i32) -> (i32, i32) {
    %c0_i32 = arith.constant 0 : i32
    %c0_i32_0 = arith.constant 0 : i32
    return %arg0, %c0_i32 : i32, i32
  }
  func.func @transform_1(%arg0: i32) -> (i32, i32) {
    %c0_i32 = arith.constant 0 : i32
    %c0_i32_0 = arith.constant 0 : i32
    return %arg0, %c0_i32 : i32, i32
  }
}

</mosaic_0001>

<llo_original>
// kernel: tpu_custom_call.1
$region0: #{tpu_custom_call.1}
  #allocation0 [shape = 'u32[]', space=smem, size = 0x4, offset = 0x4, fixed_abs, tag = 'smem constant byte address 0x4 - core index']
  #allocation1 [shape = 'u32[72,128]{1,0:T(1,128)}', space=vmem, size = 0x9000, scoped, tag = 'internal scratch']
  %s0 = inlined_call_operand.hbm [shape: f32[1,512], index: 0, kind: input, shape index: {}]
  %s1 = inlined_call_operand.hbm [shape: f32[1,512], index: 1, kind: output, shape index: {}]
  %s2 = sld [smem:[#allocation0]]
  $region18: #{tpu_custom_call.1} parent=0
    _
  %s4 = ssub.s32 1, %s2
  %s5 = scalar_select 0, %s4, %s2
  $region1: #{tpu_custom_call.1} parent=0
    #allocation2 [shape = 'u8[2048]{0}', space=vmem, size = 0x800, scoped, tag = 'input window, operand 0, single buffered']
    #allocation3 [shape = 's32[1]{0}', space=sflag, size = 0x4, scoped, tag = 'scoped memory for tpu_custom_call.1']
    #allocation4 [shape = 's32[1]{0}', space=sflag, size = 0x4, scoped, tag = 'scoped memory for tpu_custom_call.1']
    #allocation5 [shape = 'u8[2048]{0}', space=vmem, size = 0x800, scoped, tag = 'output window, operand 0, single buffered']
    %6 = vsyncpa [#allocation3], 0
    %7 = vsyncpa [#allocation4], 0
    // Predicated region
    $region2: #{tpu_custom_call.1} parent=1 // pred_check
      _
    $region3: #{tpu_custom_call.1} parent=1 // pred_check_branch
      %9 = sbr.rel (0) target = $region5
    $region4: #{tpu_custom_call.1} parent=1 // pred_region
      %11 = vsyncadd [#allocation3], 0
      %s13 = sshll.u32 %s0, 4
      %s14 = int_to_ptr.hbm [resolvable:$true] %s13
      %s15 = sshll.u32 [#allocation2], 4
      %s16 = int_to_ptr.vmem [resolvable:$true] %s15
      %18 = dma.hbm_to_vmem [thread:$0]  %s14, 64, %s16, [#allocation3]
    $region5: #{tpu_custom_call.1} parent=1 // pred_fallthru
      _
    // Predicated region
    $region6: #{tpu_custom_call.1} parent=1 // pred_check
      _
    $region7: #{tpu_custom_call.1} parent=1 // pred_check_branch
      %20 = sbr.rel (0) target = $region9
    $region8: #{tpu_custom_call.1} parent=1 // pred_region
      %22 = dma.done [#allocation3], 64
    $region9: #{tpu_custom_call.1} parent=1 // pred_fallthru
      _
    %v23 = vld [vmem:[#allocation2] sm:$0xf]
    %v24 = vmul.f32 %v23, 0.035677407
    %v25 = vmul.f32 %v24, %v23
    %v26 = vadd.f32 %v25, 0.7978846
    %v27 = vmul.f32 %v23, %v26
    %v28 = vtanh.pop %v27
    %v29 = vmul.f32 %v28, 0.5
    %v30 = vadd.f32 %v29, 0.5
    %v31 = vmul.f32 %v23, %v30
    %v32 = vlaneseq
    %vm33 = vcmp.ge.s32.totalorder %v32, 0
    %vm34 = vcmp.lt.s32.totalorder %v32, 512
    %vm35 = vmand %vm33, %vm34
    %36 = vst.msk [vmem:[#allocation5] sm:$0xf] %vm35, %v31
    // Predicated region
    $region10: #{tpu_custom_call.1} parent=1 // pred_check
      _
    $region11: #{tpu_custom_call.1} parent=1 // pred_check_branch
      %38 = sbr.rel (0) target = $region13
    $region12: #{tpu_custom_call.1} parent=1 // pred_region
      %40 = vsyncadd [#allocation4], 0
      %s42 = sshll.u32 [#allocation5], 4
      %s43 = int_to_ptr.vmem [resolvable:$true] %s42
      %s44 = sshll.u32 %s1, 4
      %s45 = int_to_ptr.hbm [resolvable:$true] %s44
      %47 = dma.vmem_to_hbm [thread:$0]  %s43, 64, %s45, [#allocation4]
    $region13: #{tpu_custom_call.1} parent=1 // pred_fallthru
      _
    // Predicated region
    $region14: #{tpu_custom_call.1} parent=1 // pred_check
      _
    $region15: #{tpu_custom_call.1} parent=1 // pred_check_branch
      %49 = sbr.rel (0) target = $region17
    $region16: #{tpu_custom_call.1} parent=1 // pred_region
      %51 = dma.done [#allocation4], 64
    $region17: #{tpu_custom_call.1} parent=1 // pred_fallthru
      _
    %52 = vsyncpa [#allocation3], 1
    %53 = vsyncpa [#allocation4], 1

</llo_original>
